<compile_context>
chip_gen: v7x
topology: tpu7x:2x2x1
jax: 0.10.0
libtpu: 0.0.40
codegen_flags: <defaults>
</compile_context>

<pallas_src>
import jax
import jax.numpy as jnp
from jax.experimental import pallas as pl
from jax.experimental.pallas import tpu as pltpu

_LANE = 128   # vreg lane width
_SUB = 8      # f32 sublane count


def _round_up(x, m):
    return ((x + m - 1) // m) * m


def wf_kernel(x_ref, w_ref, b_ref, o_ref):
    # x_ref: (tile_b, Np)  w_ref: (Np, tile_h)  b_ref: (1, tile_h)  o_ref: (tile_b, tile_h)
    acc = jnp.dot(x_ref[...], w_ref[...], preferred_element_type=jnp.float32)
    acc = acc + b_ref[...]                       # f32 bias add (broadcast over rows)
    o_ref[...] = jax.nn.sigmoid(acc).astype(o_ref.dtype)  # EUP sigmoid in f32


def wf_forward(x, weight, bias, *, tile_b=None, tile_h=None, use_bf16=True):
    """sigmoid(x @ weight.T + bias) — matches torch.sigmoid(nn.Linear(N, HIDDEN)(x)).

    x: (B, N) f32; weight: (HIDDEN, N) torch layout; bias: (HIDDEN,).
    """
    B, N = x.shape
    H, N2 = weight.shape
    assert N == N2 and bias.shape == (H,)

    # --- pad to hardware-friendly shapes (lane-dense output, aligned contraction) ---
    Bp = _round_up(B, _SUB)
    Np = _round_up(N, _LANE)
    Hp = _round_up(H, _LANE)

    w_t = weight.T                                   # (N, H)
    x_p = jnp.pad(x, ((0, Bp - B), (0, Np - N)))
    w_p = jnp.pad(w_t, ((0, Np - N), (0, Hp - H)))
    b_p = jnp.pad(bias.reshape(1, H), ((0, 0), (0, Hp - H))).astype(jnp.float32)

    if use_bf16:                                     # MXU-friendly inputs (v6e/v7x)
        x_p = x_p.astype(jnp.bfloat16)
        w_p = w_p.astype(jnp.bfloat16)
    in_itemsize = jnp.dtype(x_p.dtype).itemsize

    # --- tile selection ---
    if tile_b is None:
        tile_b = min(Bp, 512)                        # big enough to amortize ~0.35us/step
        if Bp >= 2 * _SUB:
            # expose >= 2 batch blocks so v7x's two TensorCores both get work
            tile_b = min(tile_b, _round_up((Bp + 1) // 2, _SUB))
    if tile_h is None:
        # cap the (double-buffered) weight tile at ~8 MiB so it fits v7x's 64 MiB VMEM
        weight_budget = 8 * 1024 * 1024
        max_th = max(_LANE, (weight_budget // max(1, Np * in_itemsize)) // _LANE * _LANE)
        tile_h = min(Hp, max_th)

    grid = (pl.cdiv(Bp, tile_b), pl.cdiv(Hp, tile_h))

    # explicit VMEM budget (double-buffered blocks) with headroom, clamped for portability
    est = 2 * (tile_b * Np * in_itemsize + Np * tile_h * in_itemsize
               + tile_h * 4 + tile_b * tile_h * 4)
    vmem_limit = int(min(max(2 * est, 32 * 1024 * 1024), 64 * 1024 * 1024))

    out_p = pl.pallas_call(
        wf_kernel,
        out_shape=jax.ShapeDtypeStruct((Bp, Hp), x.dtype),
        grid_spec=pltpu.PrefetchScalarGridSpec(
            num_scalar_prefetch=0,
            grid=grid,
            in_specs=[
                pl.BlockSpec((tile_b, Np), lambda i, j: (i, 0)),    # x: resident across H axis
                pl.BlockSpec((Np, tile_h), lambda i, j: (0, j)),    # W: constant across batch axis
                pl.BlockSpec((1, tile_h), lambda i, j: (0, j)),     # bias
            ],
            out_specs=pl.BlockSpec((tile_b, tile_h), lambda i, j: (i, j)),
        ),
        compiler_params=pltpu.CompilerParams(
            dimension_semantics=("parallel", "parallel"),
            vmem_limit_bytes=vmem_limit,
        ),
    )(x_p, w_p, b_p)

    return out_p[:B, :H]


if __name__ == "__main__":
    # Small shapes consistent with the module: batch=8, N=32, HIDDEN=32
    B, N, HIDDEN = 8, 32, 32
    key = jax.random.PRNGKey(0)
    kx, kw, kb = jax.random.split(key, 3)

    # Deterministic init (mimics nn.Linear's uniform(-1/sqrt(N), 1/sqrt(N)))
    bound = float(1.0 / (N ** 0.5))
    weight = jax.random.uniform(kw, (HIDDEN, N), jnp.float32, -bound, bound)  # torch layout
    bias = jax.random.uniform(kb, (HIDDEN,), jnp.float32, -bound, bound)
    x = jax.random.normal(kx, (B, N), jnp.float32)

    # Reference (plain JAX, f32)
    ref = jax.nn.sigmoid(x @ weight.T + bias[None, :])

    # Exact f32 path (bit-accurate semantics of the torch forward)
    out_f32 = jax.block_until_ready(wf_forward(x, weight, bias, use_bf16=False))
    assert out_f32.shape == (B, HIDDEN)
    assert jnp.allclose(out_f32, ref, atol=1e-5, rtol=1e-5), "f32 path mismatch vs reference"

    # bf16-input MXU path (v6e/v7x fast path), f32 accumulate/bias/sigmoid
    out_bf16 = jax.block_until_ready(wf_forward(x, weight, bias, use_bf16=True))
    assert out_bf16.shape == (B, HIDDEN)
    assert jnp.allclose(out_bf16, ref, atol=2e-2), "bf16 path mismatch vs reference"

    print("KERNEL_OK")
</pallas_src>

<mosaic_0001>
module attributes {stable_mosaic.version = 11 : i64} {
  func.func @wf_kernel(%arg0: i32, %arg1: i32, %arg2: memref<8x128xf32, #tpu.memory_space<vmem>>, %arg3: memref<128x128xf32, #tpu.memory_space<vmem>>, %arg4: memref<1x128xf32, #tpu.memory_space<vmem>>, %arg5: memref<8x128xf32, #tpu.memory_space<vmem>>) attributes {dimension_semantics = [#tpu.dimension_semantics<parallel>, #tpu.dimension_semantics<parallel>], iteration_bounds = array<i64: 1, 1>, scalar_prefetch = 0 : i64, scratch_operands = 0 : i64, tpu.core_type = #tpu.core_type<tc>, window_params = [{transform_indices = @transform_0, window_bounds = array<i64: 8, 128>}, {transform_indices = @transform_1, window_bounds = array<i64: 128, 128>}, {transform_indices = @transform_2, window_bounds = array<i64: 1, 128>}, {transform_indices = @transform_3, window_bounds = array<i64: 8, 128>}]} {
    %c0 = arith.constant 0 : index
    %c0_0 = arith.constant 0 : index
    %0 = vector.load %arg2[%c0, %c0_0] : memref<8x128xf32, #tpu.memory_space<vmem>>, vector<8x128xf32>
    %c0_1 = arith.constant 0 : index
    %c0_2 = arith.constant 0 : index
    %1 = vector.load %arg3[%c0_1, %c0_2] : memref<128x128xf32, #tpu.memory_space<vmem>>, vector<128x128xf32>
    %cst = arith.constant dense<0.000000e+00> : vector<8x128xf32>
    %2 = tpu.matmul %0, %1, %cst {dimension_numbers = #tpu.dot_dimension_numbers<[1], [0], [0], [1], [0, 0, 1, 1], [], []>} : vector<8x128xf32>, vector<128x128xf32>, vector<8x128xf32> -> vector<8x128xf32>
    %c0_3 = arith.constant 0 : index
    %c0_4 = arith.constant 0 : index
    %3 = vector.load %arg4[%c0_3, %c0_4] : memref<1x128xf32, #tpu.memory_space<vmem>>, vector<1x128xf32>
    %4 = vector.broadcast %3 : vector<1x128xf32> to vector<8x128xf32>
    %5 = arith.addf %2, %4 : vector<8x128xf32>
    %6 = arith.negf %5 : vector<8x128xf32>
    %7 = math.exp %6 : vector<8x128xf32>
    %cst_5 = arith.constant 1.000000e+00 : f32
    %8 = vector.broadcast %cst_5 : f32 to vector<8x128xf32>
    %9 = arith.addf %8, %7 : vector<8x128xf32>
    %10 = arith.divf %8, %9 : vector<8x128xf32>
    %c0_6 = arith.constant 0 : index
    %c0_7 = arith.constant 0 : index
    %11 = vector.load %arg5[%c0_6, %c0_7] : memref<8x128xf32, #tpu.memory_space<vmem>>, vector<8x128xf32>
    tpu.vector_store %arg5[%c0_6, %c0_7], %10 {strides = array<i32>} : memref<8x128xf32, #tpu.memory_space<vmem>>, vector<8x128xf32>,
    return
  }
  func.func @transform_0(%arg0: i32, %arg1: i32) -> (i32, i32) {
    %c0_i32 = arith.constant 0 : i32
    %c0_i32_0 = arith.constant 0 : i32
    return %arg0, %c0_i32 : i32, i32
  }
  func.func @transform_1(%arg0: i32, %arg1: i32) -> (i32, i32) {
    %c0_i32 = arith.constant 0 : i32
    %c0_i32_0 = arith.constant 0 : i32
    return %c0_i32, %arg1 : i32, i32
  }
  func.func @transform_2(%arg0: i32, %arg1: i32) -> (i32, i32) {
    %c0_i32 = arith.constant 0 : i32
    %c0_i32_0 = arith.constant 0 : i32
    return %c0_i32, %arg1 : i32, i32
  }
  func.func @transform_3(%arg0: i32, %arg1: i32) -> (i32, i32) {
    %c0_i32 = arith.constant 0 : i32
    return %arg0, %arg1 : i32, i32
  }
}

</mosaic_0001>

<llo_original>
// kernel: tpu_custom_call.1
$region0: #{tpu_custom_call.1}
  #allocation0 [shape = 'u32[]', space=smem, size = 0x4, offset = 0x4, fixed_abs, tag = 'smem constant byte address 0x4 - core index']
  #allocation1 [shape = 'u32[144,128]{1,0:T(1,128)}', space=vmem, size = 0x12000, scoped, tag = 'internal scratch']
  %s0 = inlined_call_operand.hbm [shape: f32[8,128], index: 0, kind: input, shape index: {}]
  %s1 = inlined_call_operand.hbm [shape: f32[128,128], index: 1, kind: input, shape index: {}]
  %s2 = inlined_call_operand.vmem [shape: f32[1,128], index: 2, kind: input, shape index: {}]
  %s3 = inlined_call_operand.hbm [shape: f32[8,128], index: 3, kind: output, shape index: {}]
  %s4 = sld [smem:[#allocation0]]
  $region30: #{tpu_custom_call.1} parent=0
    _
  %s6 = ssub.s32 1, %s4
  %s7 = scalar_select 0, %s6, %s4
  $region1: #{tpu_custom_call.1} parent=0
    #allocation2 [shape = 'u8[4096]{0}', space=vmem, size = 0x1000, scoped, tag = 'input window, operand 0, single buffered']
    #allocation3 [shape = 's32[1]{0}', space=sflag, size = 0x4, scoped, tag = 'scoped memory for tpu_custom_call.1']
    #allocation4 [shape = 's32[1]{0}', space=sflag, size = 0x4, scoped, tag = 'scoped memory for tpu_custom_call.1']
    #allocation5 [shape = 'u8[65536]{0}', space=vmem, size = 0x10000, scoped, tag = 'input window, operand 1, single buffered']
    #allocation6 [shape = 's32[1]{0}', space=sflag, size = 0x4, scoped, tag = 'scoped memory for tpu_custom_call.1']
    #allocation7 [shape = 'u8[4096]{0}', space=vmem, size = 0x1000, scoped, tag = 'output window, operand 0, single buffered']
    %8 = vsyncpa [#allocation3], 0
    %9 = vsyncpa [#allocation6], 0
    %10 = vsyncpa [#allocation4], 0
    // Predicated region
    $region2: #{tpu_custom_call.1} parent=1 // pred_check
      _
    $region3: #{tpu_custom_call.1} parent=1 // pred_check_branch
      %12 = sbr.rel (0) target = $region5
    $region4: #{tpu_custom_call.1} parent=1 // pred_region
      %s14 = ssub.s32 128, 128
      %15 = vsyncadd [#allocation3], %s14
      %s17 = sshll.u32 [#allocation2], 4
      %s18 = int_to_ptr.vmem [resolvable:$true] %s17
      %20 = dma.hbm_to_vmem [thread:$0]  %s0, 128, %s18, [#allocation3]
    $region5: #{tpu_custom_call.1} parent=1 // pred_fallthru
      _
    // Predicated region
    $region6: #{tpu_custom_call.1} parent=1 // pred_check
      _
    $region7: #{tpu_custom_call.1} parent=1 // pred_check_branch
      %22 = sbr.rel (0) target = $region9
    $region8: #{tpu_custom_call.1} parent=1 // pred_region
      %s24 = ssub.s32 2048, 2048
      %25 = vsyncadd [#allocation6], %s24
      %s26 = sshll.u32 [#allocation5], 4
      %s27 = int_to_ptr.vmem [resolvable:$true] %s26
      %32 = dma.hbm_to_vmem [thread:$0]  %s1, 2048, %s27, [#allocation6], 128, 128, 8
    $region9: #{tpu_custom_call.1} parent=1 // pred_fallthru
      _
    // Predicated region
    $region10: #{tpu_custom_call.1} parent=1 // pred_check
      _
    $region11: #{tpu_custom_call.1} parent=1 // pred_check_branch
      %34 = sbr.rel (0) target = $region13
    $region12: #{tpu_custom_call.1} parent=1 // pred_region
      _
    $region13: #{tpu_custom_call.1} parent=1 // pred_fallthru
      _
    // Predicated region
    $region14: #{tpu_custom_call.1} parent=1 // pred_check
      _
    $region15: #{tpu_custom_call.1} parent=1 // pred_check_branch
      %36 = sbr.rel (0) target = $region17
    $region16: #{tpu_custom_call.1} parent=1 // pred_region
      %37 = dma.done [#allocation3], 128
    $region17: #{tpu_custom_call.1} parent=1 // pred_fallthru
      _
    // Predicated region
    $region18: #{tpu_custom_call.1} parent=1 // pred_check
      _
    $region19: #{tpu_custom_call.1} parent=1 // pred_check_branch
      %39 = sbr.rel (0) target = $region21
    $region20: #{tpu_custom_call.1} parent=1 // pred_region
      %40 = dma.done [#allocation6], 2048
    $region21: #{tpu_custom_call.1} parent=1 // pred_fallthru
      _
    %v41 = vld [vmem:[#allocation2] sm:$0xff]
    %v42 = vld [vmem:[#allocation5] sm:$0xff]
    %v43 = vld [vmem:[#allocation5 + $0x8] sm:$0xff]
    %v44 = vld [vmem:[#allocation5 + $0x10] sm:$0xff]
    %v45 = vld [vmem:[#allocation5 + $0x18] sm:$0xff]
    %v46 = vld [vmem:[#allocation5 + $0x20] sm:$0xff]
    %v47 = vld [vmem:[#allocation5 + $0x28] sm:$0xff]
    %v48 = vld [vmem:[#allocation5 + $0x30] sm:$0xff]
    %v49 = vld [vmem:[#allocation5 + $0x38] sm:$0xff]
    %v50 = vld [vmem:[#allocation5 + $0x40] sm:$0xff]
    %v51 = vld [vmem:[#allocation5 + $0x48] sm:$0xff]
    %v52 = vld [vmem:[#allocation5 + $0x50] sm:$0xff]
    %v53 = vld [vmem:[#allocation5 + $0x58] sm:$0xff]
    %v54 = vld [vmem:[#allocation5 + $0x60] sm:$0xff]
    %v55 = vld [vmem:[#allocation5 + $0x68] sm:$0xff]
    %v56 = vld [vmem:[#allocation5 + $0x70] sm:$0xff]
    %v57 = vld [vmem:[#allocation5 + $0x78] sm:$0xff]
    %v58 = vld [vmem:[%s2] sm:$0x1]
    %v60 = vlaneseq
    %v61 = vshrl.u32 %v60, 7
    %v62 = vsub.s32 0, %v61
    %v63 = vrot.slane %v58, %v62
    %65 = vmatprep.subr.mxu0 0.0
    %66 = vmatpush1.msra.mxu0 %v42
    %67 = vmatprep.subr.mxu0 0.0
    %68 = vmatpush1.msra.mxu0 %v43
    %69 = vmatprep.subr.mxu0 0.0
    %70 = vmatpush1.msra.mxu0 %v44
    %71 = vmatprep.subr.mxu0 0.0
    %72 = vmatpush1.msra.mxu0 %v45
    %73 = vmatprep.subr.mxu0 0.0
    %74 = vmatpush1.msra.mxu0 %v46
    %75 = vmatprep.subr.mxu0 0.0
    %76 = vmatpush1.msra.mxu0 %v47
    %77 = vmatprep.subr.mxu0 0.0
    %78 = vmatpush1.msra.mxu0 %v48
    %79 = vmatprep.subr.mxu0 0.0
    %80 = vmatpush1.msra.mxu0 %v49
    %81 = vmatprep.subr.mxu0 0.0
    %82 = vmatpush1.msra.mxu0 %v50
    %83 = vmatprep.subr.mxu0 0.0
    %84 = vmatpush1.msra.mxu0 %v51
    %85 = vmatprep.subr.mxu0 0.0
    %86 = vmatpush1.msra.mxu0 %v52
    %87 = vmatprep.subr.mxu0 0.0
    %88 = vmatpush1.msra.mxu0 %v53
    %89 = vmatprep.subr.mxu0 0.0
    %90 = vmatpush1.msra.mxu0 %v54
    %91 = vmatprep.subr.mxu0 0.0
    %92 = vmatpush1.msra.mxu0 %v55
    %93 = vmatprep.subr.mxu0 0.0
    %94 = vmatpush1.msra.mxu0 %v56
    %95 = vmatprep.subr.mxu0 0.0
    %96 = vmatpush1.msra.mxu0 %v57
    %97 = vmatprep.subr.mxu0 0.0
    %98 = vmatpush1.msra.mxu0 0.0
    %99 = vmatprep.subr.mxu0 0.0
    %100 = vmatpush1.msra.mxu0 0.0
    %101 = vmatprep.subr.mxu0 0.0
    %102 = vmatpush1.msra.mxu0 0.0
    %103 = vmatprep.subr.mxu0 0.0
    %104 = vmatpush1.msra.mxu0 0.0
    %105 = vmatprep.subr.mxu0 0.0
    %106 = vmatpush1.msra.mxu0 0.0
    %107 = vmatprep.subr.mxu0 0.0
    %108 = vmatpush1.msra.mxu0 0.0
    %109 = vmatprep.subr.mxu0 0.0
    %110 = vmatpush1.msra.mxu0 0.0
    %111 = vmatprep.subr.mxu0 0.0
    %112 = vmatpush1.msra.mxu0 0.0
    %113 = vmatprep.subr.mxu0 0.0
    %114 = vmatpush1.msra.mxu0 0.0
    %115 = vmatprep.subr.mxu0 0.0
    %116 = vmatpush1.msra.mxu0 0.0
    %117 = vmatprep.subr.mxu0 0.0
    %118 = vmatpush1.msra.mxu0 0.0
    %119 = vmatprep.subr.mxu0 0.0
    %120 = vmatpush1.msra.mxu0 0.0
    %121 = vmatprep.subr.mxu0 0.0
    %122 = vmatpush1.msra.mxu0 0.0
    %123 = vmatprep.subr.mxu0 0.0
    %124 = vmatpush1.msra.mxu0 0.0
    %125 = vmatprep.subr.mxu0 0.0
    %126 = vmatpush1.msra.mxu0 0.0
    %127 = vmatprep.subr.mxu0 0.0
    %128 = vmatpush1.msra.mxu0 0.0
    %129 = vmatprep.mubr.f32.mxu0 0.0
    %130 = vmatmul.mubr.f32.gmra.mrb[0].mxu0 %v41
    %v131 = vpop.f32.mrb[0].mxu0
    %v132 = vadd.f32 %v63, %v131
    %v133 = vpop.f32.mrb[0].mxu0
    %134 = vdwg.mxu0
    %v135 = vxor.u32 %v132, 2147483648
    %v136 = vmul.f32 %v135, 1.442695
    %v137 = vpow.pop %v136
    %v138 = vadd.f32 %v137, 1.0
    %v139 = vrcp.pop %v138
    %v140 = vmul.f32 1.0, %v139
    %141 = vst [vmem:[#allocation7] sm:$0xff] %v140
    // Predicated region
    $region22: #{tpu_custom_call.1} parent=1 // pred_check
      _
    $region23: #{tpu_custom_call.1} parent=1 // pred_check_branch
      %143 = sbr.rel (0) target = $region25
    $region24: #{tpu_custom_call.1} parent=1 // pred_region
      %s145 = ssub.s32 128, 128
      %146 = vsyncadd [#allocation4], %s145
      %s148 = sshll.u32 [#allocation7], 4
      %s149 = int_to_ptr.vmem [resolvable:$true] %s148
      %151 = dma.vmem_to_hbm [thread:$0]  %s149, 128, %s3, [#allocation4]
    $region25: #{tpu_custom_call.1} parent=1 // pred_fallthru
      _
    // Predicated region
    $region26: #{tpu_custom_call.1} parent=1 // pred_check
      _
    $region27: #{tpu_custom_call.1} parent=1 // pred_check_branch
      %153 = sbr.rel (0) target = $region29
    $region28: #{tpu_custom_call.1} parent=1 // pred_region
      %154 = dma.done [#allocation4], 128
    $region29: #{tpu_custom_call.1} parent=1 // pred_fallthru
      _
    %155 = vsyncpa [#allocation3], 1
    %156 = vsyncpa [#allocation6], 1
    %157 = vsyncpa [#allocation4], 1

</llo_original>
